<compile_context>
chip_gen: v7x
topology: tpu7x:2x2x1
jax: 0.10.0
libtpu: 0.0.40
codegen_flags: <defaults>
</compile_context>

<pallas_src>
import functools
import math

import jax
import jax.numpy as jnp
from jax.experimental import pallas as pl
from jax.experimental.pallas import tpu as pltpu


# ---------------------------------------------------------------------------
# Kernel: fused 2-layer MLP on one batch tile of lane-packed rows.
#   relu(relu(x @ W1 + b1) @ W2 + b2)   (dropout = identity in eval mode)
# Operands arrive row-packed (`pack` logical rows folded into the 128-lane
# axis) with block-diagonal weights, so every HBM-facing load/store is
# lane-dense.  Matmuls run on the MXU with f32 accumulation; bias/ReLU on VPU.
# ---------------------------------------------------------------------------
def mlp2_kernel(x_ref, w1_ref, b1_ref, w2_ref, b2_ref, o_ref):
    x = x_ref[...]
    h = jnp.dot(x, w1_ref[...], preferred_element_type=jnp.float32)
    h = jnp.maximum(h + b1_ref[...], 0.0)
    # Dropout (layer1.dropout): identity in eval mode.
    y = jnp.dot(h.astype(w2_ref.dtype), w2_ref[...],
                preferred_element_type=jnp.float32)
    y = jnp.maximum(y + b2_ref[...], 0.0)
    # Dropout (layer2.dropout): identity in eval mode.
    o_ref[...] = y.astype(o_ref.dtype)


# ---------------------------------------------------------------------------
# Helpers
# ---------------------------------------------------------------------------
def _round_up(x, m):
    return (x + m - 1) // m * m


def _sublane(dtype):
    # Minimum sublane multiple for clean tiling of this dtype.
    return max(8, 32 // jnp.dtype(dtype).itemsize)


def _lane_pack(*dims):
    """Smallest row-pack factor making every packed feature dim a multiple of
    128 lanes (unmasked vector loads/stores)."""
    p = 1
    for d in dims:
        p = math.lcm(p, 128 // math.gcd(128, d))
    return p


def pack_mlp_params(w1, b1, w2, b2, *, weight_dtype=jnp.float32, min_pack=1,
                    max_weight_bytes=8 << 20):
    """Build the lane-packed block-diagonal weights ONCE (hoisted out of the
    per-call path so they are not re-materialized / re-streamed every call).

    w1: [Din, d1], b1: [d1], w2: [d1, d2], b2: [d2]
    Returns (pack, (w1p, b1p, w2p, b2p)).
    """
    Din, d1 = w1.shape
    d2 = w2.shape[1]
    wb = jnp.dtype(weight_dtype).itemsize

    def wbytes(p):
        return (p * Din * p * d1 + p * d1 * p * d2) * wb

    base = _lane_pack(Din, d1, d2)
    pack = base * max(1, -(-min_pack // base))          # >= min_pack, multiple of base
    while pack > base and wbytes(pack) > max_weight_bytes:
        pack -= base
    if wbytes(pack) > max_weight_bytes:
        pack = 1   # fallback: still correct, just masked (non-lane-dense) stores

    eye = jnp.eye(pack, dtype=weight_dtype)
    w1p = jnp.kron(eye, w1.astype(weight_dtype))        # [pack*Din, pack*d1]
    w2p = jnp.kron(eye, w2.astype(weight_dtype))        # [pack*d1,  pack*d2]
    # Biases stay f32 (added to the f32 accumulator); tiny.
    b1p = jnp.tile(b1.astype(jnp.float32), pack).reshape(1, pack * d1)
    b2p = jnp.tile(b2.astype(jnp.float32), pack).reshape(1, pack * d2)
    return pack, (w1p, b1p, w2p, b2p)


# ---------------------------------------------------------------------------
# Forward
# ---------------------------------------------------------------------------
@functools.partial(jax.jit, static_argnames=("pack", "tb"))
def mlp_forward(x, w1p, b1p, w2p, b2p, *, pack, tb=8192):
    """x: [B, Din] (float).  Packed params from pack_mlp_params().

    Activations at the HBM boundary use the packed-weight dtype (f32 or bf16);
    accumulation is always f32; output is returned in x's dtype.
    """
    B, Din = x.shape
    out_dtype = x.dtype
    io_dtype = w1p.dtype
    d1 = w1p.shape[1] // pack
    d2 = w2p.shape[1] // pack
    assert w1p.shape[0] == pack * Din, "packed weights do not match input dim"

    xb = jnp.dtype(io_dtype).itemsize
    ob = jnp.dtype(out_dtype).itemsize
    sub = max(_sublane(io_dtype), _sublane(out_dtype))

    # Pad the batch only up to a multiple of `pack` (at most pack-1 junk rows;
    # no full-tile padding pass, and no epilogue slice when B % pack == 0).
    B_pad = _round_up(B, pack)
    xc = x.astype(io_dtype)
    if B_pad != B:
        xc = jnp.pad(xc, ((0, B_pad - B), (0, 0)))
    rows = B_pad // pack
    xp = xc.reshape(rows, pack * Din)        # row-major: free lane fold

    # --- batch tile -------------------------------------------------------
    # Big tiles amortize the ~0.35us/grid-step overhead; clamp to the array
    # and a conservative VMEM budget (safe on v5e/v6e/v7x), and keep >= 2 grid
    # steps when possible so the "parallel" axis feeds both v7x TensorCores.
    weight_bytes = (w1p.size + w2p.size) * xb + (b1p.size + b2p.size) * 4
    per_row_bytes = 2 * pack * (Din * xb + d2 * ob) + 8 * pack * (d1 + d2)
    budget = 32 << 20
    avail = max(budget - 2 * weight_bytes - (2 << 20), 0)
    max_rows_vmem = max(sub, (avail // per_row_bytes) // sub * sub)

    trows = _round_up(max(tb // pack, 1), sub)
    trows = min(trows, max_rows_vmem)
    if trows >= rows:
        trows = rows                                   # single full block (legal)
        if rows >= 2 * sub:
            trows = _round_up(pl.cdiv(rows, 2), sub)   # >=2 steps for v7x megacore
    grid_steps = pl.cdiv(rows, trows)                  # ragged last block handled

    est_vmem = (2 * trows * pack * (Din * xb + d2 * ob)
                + 2 * weight_bytes
                + 8 * trows * pack * (d1 + d2)
                + (2 << 20))
    vmem_limit = None if est_vmem <= (16 << 20) else int(min(est_vmem, 64 << 20))

    cost = pl.CostEstimate(
        flops=2 * rows * (w1p.shape[0] * w1p.shape[1]
                          + w2p.shape[0] * w2p.shape[1]),
        transcendentals=0,
        bytes_accessed=(xp.size * xb + rows * pack * d2 * ob + weight_bytes),
    )

    outp = pl.pallas_call(
        mlp2_kernel,
        out_shape=jax.ShapeDtypeStruct((rows, pack * d2), out_dtype),
        grid_spec=pltpu.PrefetchScalarGridSpec(
            num_scalar_prefetch=0,
            grid=(grid_steps,),
            in_specs=[
                pl.BlockSpec((trows, pack * Din), lambda i: (i, 0)),      # x tile
                # Weights/biases: constant index map -> fetched once, VMEM-resident.
                pl.BlockSpec((pack * Din, pack * d1), lambda i: (0, 0)),  # W1
                pl.BlockSpec((1, pack * d1), lambda i: (0, 0)),           # b1
                pl.BlockSpec((pack * d1, pack * d2), lambda i: (0, 0)),   # W2
                pl.BlockSpec((1, pack * d2), lambda i: (0, 0)),           # b2
            ],
            out_specs=pl.BlockSpec((trows, pack * d2), lambda i: (i, 0)),
        ),
        compiler_params=pltpu.CompilerParams(
            dimension_semantics=("parallel",),
            vmem_limit_bytes=vmem_limit),
        cost_estimate=cost,
    )(xp, w1p, b1p, w2p, b2p)

    out = outp.reshape(B_pad, d2)
    if B_pad != B:
        out = out[:B]
    return out


def init_params(key, in_features, d1, d2, dtype=jnp.float32):
    """Deterministic nn.Linear-style init (uniform +/- 1/sqrt(fan_in))."""
    k1, k2, k3, k4 = jax.random.split(key, 4)
    lim1 = 1.0 / (in_features ** 0.5)
    lim2 = 1.0 / (d1 ** 0.5)
    # PyTorch Linear stores weight as [out, in]; we keep [in, out] for the kernel.
    w1 = jax.random.uniform(k1, (in_features, d1), dtype, -lim1, lim1)
    b1 = jax.random.uniform(k2, (d1,), dtype, -lim1, lim1)
    w2 = jax.random.uniform(k3, (d1, d2), dtype, -lim2, lim2)
    b2 = jax.random.uniform(k4, (d2,), dtype, -lim2, lim2)
    return w1, b1, w2, b2


if __name__ == "__main__":
    # Static-encoder config: num_layer=2, layer1.dim=32, layer2.dim=32,
    # dropout=0.1 (identity in eval).  batch=200 gives a 2-step parallel grid
    # with a ragged last block (no batch padding needed since 200 % 8 == 0).
    batch, in_features, d1, d2 = 200, 16, 32, 32

    key = jax.random.PRNGKey(0)
    kx, kp = jax.random.split(key)
    x = jax.random.normal(kx, (batch, in_features), jnp.float32)
    w1, b1, w2, b2 = init_params(kp, in_features, d1, d2)

    # Pure-JAX reference of the same forward pass (eval-mode dropout).
    ref = jnp.maximum(jnp.maximum(x @ w1 + b1, 0.0) @ w2 + b2, 0.0)

    # ---- f32 path: exact parity with the PyTorch reference -----------------
    pack, params = pack_mlp_params(w1, b1, w2, b2, weight_dtype=jnp.float32)
    out = mlp_forward(x, *params, pack=pack)
    jax.block_until_ready(out)
    assert out.shape == (batch, d2)
    assert jnp.allclose(out, ref, atol=1e-4, rtol=1e-4), float(
        jnp.max(jnp.abs(out - ref)))

    # ---- bf16 HBM-boundary path (half the dominant HBM bytes, f32 accum) ---
    # min_pack=16 -> pack*Din = 256 fills the MXU K dim on v6e/v7x and widens
    # the lane-dense slabs; output stays f32.
    pack_bf, params_bf = pack_mlp_params(
        w1, b1, w2, b2, weight_dtype=jnp.bfloat16, min_pack=16)
    out_bf = mlp_forward(x, *params_bf, pack=pack_bf)
    jax.block_until_ready(out_bf)
    assert out_bf.shape == (batch, d2)
    assert jnp.allclose(out_bf, ref, atol=5e-2, rtol=5e-2), float(
        jnp.max(jnp.abs(out_bf - ref)))

    print("KERNEL_OK")
</pallas_src>

<mosaic_0001>
module attributes {stable_mosaic.version = 11 : i64} {
  func.func @mlp2_kernel(%arg0: i32, %arg1: memref<16x128xf32, #tpu.memory_space<vmem>>, %arg2: memref<128x256xf32, #tpu.memory_space<vmem>>, %arg3: memref<1x256xf32, #tpu.memory_space<vmem>>, %arg4: memref<256x256xf32, #tpu.memory_space<vmem>>, %arg5: memref<1x256xf32, #tpu.memory_space<vmem>>, %arg6: memref<16x256xf32, #tpu.memory_space<vmem>>) attributes {dimension_semantics = [#tpu.dimension_semantics<parallel>], iteration_bounds = array<i64: 2>, scalar_prefetch = 0 : i64, scratch_operands = 0 : i64, tpu.core_type = #tpu.core_type<tc>, window_params = [{transform_indices = @transform_0, window_bounds = array<i64: 16, 128>}, {pipeline_mode = #tpu.pipeline_mode<synchronous>, transform_indices = @transform_1, window_bounds = array<i64: 128, 256>}, {pipeline_mode = #tpu.pipeline_mode<synchronous>, transform_indices = @transform_2, window_bounds = array<i64: 1, 256>}, {pipeline_mode = #tpu.pipeline_mode<synchronous>, transform_indices = @transform_3, window_bounds = array<i64: 256, 256>}, {pipeline_mode = #tpu.pipeline_mode<synchronous>, transform_indices = @transform_4, window_bounds = array<i64: 1, 256>}, {transform_indices = @transform_5, window_bounds = array<i64: 16, 256>}]} {
    %c0 = arith.constant 0 : index
    %c0_0 = arith.constant 0 : index
    %0 = vector.load %arg1[%c0, %c0_0] : memref<16x128xf32, #tpu.memory_space<vmem>>, vector<16x128xf32>
    %c0_1 = arith.constant 0 : index
    %c0_2 = arith.constant 0 : index
    %1 = vector.load %arg2[%c0_1, %c0_2] : memref<128x256xf32, #tpu.memory_space<vmem>>, vector<128x256xf32>
    %cst = arith.constant dense<0.000000e+00> : vector<16x256xf32>
    %2 = tpu.matmul %0, %1, %cst {dimension_numbers = #tpu.dot_dimension_numbers<[1], [0], [0], [1], [0, 0, 1, 1], [], []>} : vector<16x128xf32>, vector<128x256xf32>, vector<16x256xf32> -> vector<16x256xf32>
    %c0_3 = arith.constant 0 : index
    %c0_4 = arith.constant 0 : index
    %3 = vector.load %arg3[%c0_3, %c0_4] : memref<1x256xf32, #tpu.memory_space<vmem>>, vector<1x256xf32>
    %4 = vector.broadcast %3 : vector<1x256xf32> to vector<16x256xf32>
    %5 = arith.addf %2, %4 : vector<16x256xf32>
    %cst_5 = arith.constant 0.000000e+00 : f32
    %6 = vector.broadcast %cst_5 : f32 to vector<16x256xf32>
    %7 = arith.maximumf %5, %6 : vector<16x256xf32>
    %c0_6 = arith.constant 0 : index
    %c0_7 = arith.constant 0 : index
    %8 = vector.load %arg4[%c0_6, %c0_7] : memref<256x256xf32, #tpu.memory_space<vmem>>, vector<256x256xf32>
    %cst_8 = arith.constant dense<0.000000e+00> : vector<16x256xf32>
    %9 = tpu.matmul %7, %8, %cst_8 {dimension_numbers = #tpu.dot_dimension_numbers<[1], [0], [0], [1], [0, 0, 1, 1], [], []>} : vector<16x256xf32>, vector<256x256xf32>, vector<16x256xf32> -> vector<16x256xf32>
    %c0_9 = arith.constant 0 : index
    %c0_10 = arith.constant 0 : index
    %10 = vector.load %arg5[%c0_9, %c0_10] : memref<1x256xf32, #tpu.memory_space<vmem>>, vector<1x256xf32>
    %11 = vector.broadcast %10 : vector<1x256xf32> to vector<16x256xf32>
    %12 = arith.addf %9, %11 : vector<16x256xf32>
    %cst_11 = arith.constant 0.000000e+00 : f32
    %13 = vector.broadcast %cst_11 : f32 to vector<16x256xf32>
    %14 = arith.maximumf %12, %13 : vector<16x256xf32>
    %c0_12 = arith.constant 0 : index
    %c0_13 = arith.constant 0 : index
    %15 = vector.load %arg6[%c0_12, %c0_13] : memref<16x256xf32, #tpu.memory_space<vmem>>, vector<16x256xf32>
    tpu.vector_store %arg6[%c0_12, %c0_13], %14 {strides = array<i32>} : memref<16x256xf32, #tpu.memory_space<vmem>>, vector<16x256xf32>,
    return
  }
  func.func @transform_0(%arg0: i32) -> (i32, i32) {
    %c0_i32 = arith.constant 0 : i32
    %c0_i32_0 = arith.constant 0 : i32
    return %arg0, %c0_i32 : i32, i32
  }
  func.func @transform_1(%arg0: i32) -> (i32, i32) {
    %c0_i32 = arith.constant 0 : i32
    %c0_i32_0 = arith.constant 0 : i32
    %c0_i32_1 = arith.constant 0 : i32
    return %c0_i32, %c0_i32_0 : i32, i32
  }
  func.func @transform_2(%arg0: i32) -> (i32, i32) {
    %c0_i32 = arith.constant 0 : i32
    %c0_i32_0 = arith.constant 0 : i32
    %c0_i32_1 = arith.constant 0 : i32
    return %c0_i32, %c0_i32_0 : i32, i32
  }
  func.func @transform_3(%arg0: i32) -> (i32, i32) {
    %c0_i32 = arith.constant 0 : i32
    %c0_i32_0 = arith.constant 0 : i32
    %c0_i32_1 = arith.constant 0 : i32
    return %c0_i32, %c0_i32_0 : i32, i32
  }
  func.func @transform_4(%arg0: i32) -> (i32, i32) {
    %c0_i32 = arith.constant 0 : i32
    %c0_i32_0 = arith.constant 0 : i32
    %c0_i32_1 = arith.constant 0 : i32
    return %c0_i32, %c0_i32_0 : i32, i32
  }
  func.func @transform_5(%arg0: i32) -> (i32, i32) {
    %c0_i32 = arith.constant 0 : i32
    %c0_i32_0 = arith.constant 0 : i32
    return %arg0, %c0_i32 : i32, i32
  }
}

</mosaic_0001>

<llo_original>
// kernel: mlp_forward.1
$region0: #{mlp_forward.1}
  #allocation0 [shape = 'u32[]', space=smem, size = 0x4, offset = 0x4, fixed_abs, tag = 'smem constant byte address 0x4 - core index']
  #allocation1 [shape = 'u32[144,128]{1,0:T(1,128)}', space=vmem, size = 0x12000, scoped, tag = 'internal scratch']
  %s0 = inlined_call_operand.vmem [shape: f32[25,128], index: 0, kind: input, shape index: {}]
  %s1 = inlined_call_operand.vmem [shape: f32[128,256], index: 1, kind: input, shape index: {}]
  %s2 = inlined_call_operand.vmem [shape: f32[1,256], index: 2, kind: input, shape index: {}]
  %s3 = inlined_call_operand.hbm [shape: f32[256,256], index: 3, kind: input, shape index: {}]
  %s4 = inlined_call_operand.vmem [shape: f32[1,256], index: 4, kind: input, shape index: {}]
  %s5 = inlined_call_operand.vmem [shape: f32[25,256], index: 5, kind: output, shape index: {}]
  %s6 = sld [smem:[#allocation0]]
  $region57: #{mlp_forward.1} parent=0
    _
  %s8 = ssub.s32 1, %s6
  %s9 = scalar_select 0, %s8, %s6
  $region1: #{mlp_forward.1} parent=0
    #allocation2 [shape = 'u8[262144]{0}', space=vmem, size = 0x40000, scoped, tag = 'input window, operand 3, single buffered']
    #allocation3 [shape = 's32[2]{0}', space=sflag, size = 0x8, scoped, tag = 'scoped memory for mlp_forward.1']
    %10 = vsyncpa [#allocation3], 0
    loop: start=0, step=1, limit=4
    $region2: #{mlp_forward.1} parent=1 // loop_pre_header
      _
    $region3: #{mlp_forward.1} parent=1 // loop_header
      %s12 = sphi 0, %s16
      %p13 = scmp.ge.s32.totalorder %s12, 4
      %s22 = sphi 0, %s24
      %s25 = sphi 0, %s22
      %s26 = sphi 0, %s25
      %s42 = sphi 0, %s26
      %s46 = sphi 0, %s46
      %s48 = sphi 0, %s46
      %s49 = sphi 0, %s48
      %s63 = sphi 0, %s49
      %s67 = sphi 0, %s67
      %s69 = sphi 0, %s67
      %s70 = sphi 0, %s69
      %s84 = sphi 0, %s70
      %s88 = sphi 0, %s88
      %s90 = sphi 0, %s88
      %s91 = sphi 0, %s90
      %s105 = sphi 0, %s91
      %s109 = sphi 0, %s109
      %s111 = sphi 0, %s109
      %s112 = sphi 0, %s111
      %s126 = sphi 0, %s112
      %s132 = sphi 0, %s134
      %s135 = sphi 0, %s132
      %s136 = sphi 0, %s135
      %s152 = sphi 0, %s136
    $region4: #{mlp_forward.1} parent=1 // loop_header_branch
      %15 = sbr.rel (%p13) target = $region8
    $region5: #{mlp_forward.1} parent=1 // loop_body
      %s17 = ssub.s32 %s12, 1
      %s18 = ssub.s32 %s12, 2
      %s19 = sadd.s32 %s12, 1
      %s20 = ssub.s32 %s12, %s19
      %p21 = scmp.eq.s32.totalorder %s20, 0
      %s23 = sadd.s32 %s22, 1
      %s24 = scalar_select %p21, %s22, %s23
      %p27 = pneg %p21
      %p28 = scmp.eq.s32.totalorder %s12, 1
      %p29 = por %p27, %p28
      %p30 = scmp.ne.s32.totalorder %s22, %s25
      %p31 = scmp.eq.s32.totalorder %s12, 0
      %p32 = por %p30, %p31
      %p33 = scmp.ne.s32.totalorder %s22, %s25
      %p34 = scmp.eq.s32.totalorder %s17, 1
      %p35 = por %p33, %p34
      %p36 = scmp.ne.s32.totalorder %s25, %s26
      %p37 = scmp.eq.s32.totalorder %s17, 0
      %p38 = por %p36, %p37
      %p39 = scmp.ne.s32.totalorder %s25, %s26
      %p40 = scmp.eq.s32.totalorder %s18, 1
      %p41 = por %p39, %p40
      %p43 = scmp.ne.s32.totalorder %s26, %s42
      %p44 = scmp.eq.s32.totalorder %s18, 0
      %p45 = por %p43, %p44
      %s47 = sadd.s32 %s46, 1
      %p50 = scmp.eq.s32.totalorder %s12, 1
      %p51 = scmp.ne.s32.totalorder %s46, %s48
      %p52 = scmp.eq.s32.totalorder %s12, 0
      %p53 = por %p51, %p52
      %p54 = scmp.ne.s32.totalorder %s46, %s48
      %p55 = scmp.eq.s32.totalorder %s17, 1
      %p56 = por %p54, %p55
      %p57 = scmp.ne.s32.totalorder %s48, %s49
      %p58 = scmp.eq.s32.totalorder %s17, 0
      %p59 = por %p57, %p58
      %p60 = scmp.ne.s32.totalorder %s48, %s49
      %p61 = scmp.eq.s32.totalorder %s18, 1
      %p62 = por %p60, %p61
      %p64 = scmp.ne.s32.totalorder %s49, %s63
      %p65 = scmp.eq.s32.totalorder %s18, 0
      %p66 = por %p64, %p65
      %s68 = sadd.s32 %s67, 1
      %p71 = scmp.eq.s32.totalorder %s12, 1
      %p72 = scmp.ne.s32.totalorder %s67, %s69
      %p73 = scmp.eq.s32.totalorder %s12, 0
      %p74 = por %p72, %p73
      %p75 = scmp.ne.s32.totalorder %s67, %s69
      %p76 = scmp.eq.s32.totalorder %s17, 1
      %p77 = por %p75, %p76
      %p78 = scmp.ne.s32.totalorder %s69, %s70
      %p79 = scmp.eq.s32.totalorder %s17, 0
      %p80 = por %p78, %p79
      %p81 = scmp.ne.s32.totalorder %s69, %s70
      %p82 = scmp.eq.s32.totalorder %s18, 1
      %p83 = por %p81, %p82
      %p85 = scmp.ne.s32.totalorder %s70, %s84
      %p86 = scmp.eq.s32.totalorder %s18, 0
      %p87 = por %p85, %p86
      %s89 = sadd.s32 %s88, 1
      %p92 = scmp.eq.s32.totalorder %s12, 1
      %p93 = scmp.ne.s32.totalorder %s88, %s90
      %p94 = scmp.eq.s32.totalorder %s12, 0
      %p95 = por %p93, %p94
      %p96 = scmp.ne.s32.totalorder %s88, %s90
      %p97 = scmp.eq.s32.totalorder %s17, 1
      %p98 = por %p96, %p97
      %p99 = scmp.ne.s32.totalorder %s90, %s91
      %p100 = scmp.eq.s32.totalorder %s17, 0
      %p101 = por %p99, %p100
      %p102 = scmp.ne.s32.totalorder %s90, %s91
      %p103 = scmp.eq.s32.totalorder %s18, 1
      %p104 = por %p102, %p103
      %p106 = scmp.ne.s32.totalorder %s91, %s105
      %p107 = scmp.eq.s32.totalorder %s18, 0
      %p108 = por %p106, %p107
      %s110 = sadd.s32 %s109, 1
      %p113 = scmp.eq.s32.totalorder %s12, 1
      %p114 = scmp.ne.s32.totalorder %s109, %s111
      %p115 = scmp.eq.s32.totalorder %s12, 0
      %p116 = por %p114, %p115
      %p117 = scmp.ne.s32.totalorder %s109, %s111
      %p118 = scmp.eq.s32.totalorder %s17, 1
      %p119 = por %p117, %p118
      %p120 = scmp.ne.s32.totalorder %s111, %s112
      %p121 = scmp.eq.s32.totalorder %s17, 0
      %p122 = por %p120, %p121
      %p123 = scmp.ne.s32.totalorder %s111, %s112
      %p124 = scmp.eq.s32.totalorder %s18, 1
      %p125 = por %p123, %p124
      %p127 = scmp.ne.s32.totalorder %s112, %s126
      %p128 = scmp.eq.s32.totalorder %s18, 0
      %p129 = por %p127, %p128
      %s130 = ssub.s32 %s12, %s19
      %p131 = scmp.eq.s32.totalorder %s130, 0
      %s133 = sadd.s32 %s132, 1
      %s134 = scalar_select %p131, %s132, %s133
      %p137 = pneg %p131
      %p138 = scmp.eq.s32.totalorder %s12, 1
      %p139 = por %p137, %p138
      %p140 = scmp.ne.s32.totalorder %s132, %s135
      %p141 = scmp.eq.s32.totalorder %s12, 0
      %p142 = por %p140, %p141
      %p143 = scmp.ne.s32.totalorder %s132, %s135
      %p144 = scmp.eq.s32.totalorder %s17, 1
      %p145 = por %p143, %p144
      %p146 = scmp.ne.s32.totalorder %s135, %s136
      %p147 = scmp.eq.s32.totalorder %s17, 0
      %p148 = por %p146, %p147
      %p149 = scmp.ne.s32.totalorder %s135, %s136
      %p150 = scmp.eq.s32.totalorder %s18, 1
      %p151 = por %p149, %p150
      %p153 = scmp.ne.s32.totalorder %s136, %s152
      %p154 = scmp.eq.s32.totalorder %s18, 0
      %p155 = por %p153, %p154
      %p156 = scmp.le.s32.totalorder 1, %s12
      %p157 = scmp.lt.s32.totalorder %s12, 3
      %p158 = pnand %p156, %p157
      %p159 = pneg %p158
      // Predicated region
      $region9: #{mlp_forward.1} parent=5 // pred_check
        _
      $region10: #{mlp_forward.1} parent=5 // pred_check_branch
        %161 = sbr.rel (%p158) target = $region12
      $region11: #{mlp_forward.1} parent=5 // pred_region
        %s162 = ssub.s32 %s12, 1
        // Predicated region
        $region13: #{mlp_forward.1} parent=11 // pred_check
          %p163 = pneg %p59
        $region14: #{mlp_forward.1} parent=11 // pred_check_branch
          %165 = sbr.rel (%p163) target = $region16
        $region15: #{mlp_forward.1} parent=11 // pred_region
          _
        $region16: #{mlp_forward.1} parent=11 // pred_fallthru
          _
        // Predicated region
        $region17: #{mlp_forward.1} parent=11 // pred_check
          %p166 = pneg %p80
        $region18: #{mlp_forward.1} parent=11 // pred_check_branch
          %168 = sbr.rel (%p166) target = $region20
        $region19: #{mlp_forward.1} parent=11 // pred_region
          _
        $region20: #{mlp_forward.1} parent=11 // pred_fallthru
          _
        // Predicated region
        $region21: #{mlp_forward.1} parent=11 // pred_check
          %p169 = pneg %p101
        $region22: #{mlp_forward.1} parent=11 // pred_check_branch
          %171 = sbr.rel (%p169) target = $region24
        $region23: #{mlp_forward.1} parent=11 // pred_region
          %s173 = ssub.s32 8192, 8192
          %174 = vsyncadd [#allocation3], %s173
          %s175 = sshll.u32 [#allocation2], 4
          %s176 = int_to_ptr.vmem [resolvable:$true] %s175
          %181 = dma.hbm_to_vmem [thread:$0]  %s3, 8192, %s176, [#allocation3], 256, 256, 16
        $region24: #{mlp_forward.1} parent=11 // pred_fallthru
          _
        // Predicated region
        $region25: #{mlp_forward.1} parent=11 // pred_check
          %p182 = pneg %p122
        $region26: #{mlp_forward.1} parent=11 // pred_check_branch
          %184 = sbr.rel (%p182) target = $region28
        $region27: #{mlp_forward.1} parent=11 // pred_region
          _
        $region28: #{mlp_forward.1} parent=11 // pred_fallthru
          _
      $region12: #{mlp_forward.1} parent=5 // pred_fallthru
        _
      %p185 = scmp.lt.s32.totalorder %s12, 2
      // Predicated region
      $region29: #{mlp_forward.1} parent=5 // pred_check
        %p186 = pneg %p185
      $region30: #{mlp_forward.1} parent=5 // pred_check_branch
        %188 = sbr.rel (%p186) target = $region32
      $region31: #{mlp_forward.1} parent=5 // pred_region
        // Predicated region
        $region33: #{mlp_forward.1} parent=31 // pred_check
          %p189 = pneg %p32
        $region34: #{mlp_forward.1} parent=31 // pred_check_branch
          %191 = sbr.rel (%p189) target = $region36
        $region35: #{mlp_forward.1} parent=31 // pred_region
          %s192 = smul.u32 2, %s12
          %p193 = scmp.lt.s32.totalorder %s192, 3
          %s194 = scalar_select %p193, %s192, 3
          %s195 = smul.addr %s194, 8
          %s196 = scalar_lea.vmem %s0, %s195
          %s197 = smul.u32 2, %s12
        $region36: #{mlp_forward.1} parent=31 // pred_fallthru
          _
      $region32: #{mlp_forward.1} parent=5 // pred_fallthru
        _
      %p198 = scmp.le.s32.totalorder 1, %s12
      %p199 = scmp.lt.s32.totalorder %s12, 3
      %p200 = pnand %p198, %p199
      %p201 = pneg %p200
      // Predicated region
      $region37: #{mlp_forward.1} parent=5 // pred_check
        _
      $region38: #{mlp_forward.1} parent=5 // pred_check_branch
        %203 = sbr.rel (%p200) target = $region40
      $region39: #{mlp_forward.1} parent=5 // pred_region
        %s204 = ssub.s32 %s12, 1
        // Predicated region
        $region41: #{mlp_forward.1} parent=39 // pred_check
          %p205 = pneg %p101
        $region42: #{mlp_forward.1} parent=39 // pred_check_branch
          %207 = sbr.rel (%p205) target = $region44
        $region43: #{mlp_forward.1} parent=39 // pred_region
          %208 = dma.done [#allocation3], 8192
        $region44: #{mlp_forward.1} parent=39 // pred_fallthru
          _
        %s209 = smul.u32 2, %s17
        %p210 = scmp.lt.s32.totalorder %s209, 3
        %s211 = scalar_select %p210, %s209, 3
        %s212 = smul.addr %s211, 8
        %s213 = scalar_lea.vmem %s0, %s212
        %p214 = pneg %p38
        %p215 = pneg %p35
        %p216 = pneg %p59
        %p217 = pneg %p56
        %p218 = pneg %p80
        %p219 = pneg %p77
        %p220 = pneg %p101
        %p221 = pneg %p98
        %p222 = pneg %p122
        %p223 = pneg %p119
        %p224 = pneg %p148
        %p225 = pneg %p145
        %s226 = smul.u32 2, %s17
        %p227 = scmp.lt.s32.totalorder %s226, 3
        %s228 = scalar_select %p227, %s226, 3
        %s229 = smul.addr %s228, 2
        %s230 = smul.addr %s229, 8
        %s231 = scalar_lea.vmem %s5, %s230
        %s232 = smul.u32 2, %s17
        %p233 = scmp.lt.s32.totalorder %s232, 3
        %s234 = scalar_select %p233, %s232, 3
        %s235 = smul.addr %s234, 8
        %s236 = scalar_lea.vmem %s0, %s235
        %s237 = smul.u32 2, %s17
        %s238 = smul.u32 2, %s17
        %p239 = scmp.lt.s32.totalorder %s238, 3
        %s240 = scalar_select %p239, %s238, 3
        %s241 = smul.addr %s240, 2
        %s242 = smul.addr %s241, 8
        %s243 = scalar_lea.vmem %s5, %s242
        %s244 = smul.u32 2, %s17
        %v245 = vld [vmem:[%s236] sm:$0xff]
        %v246 = vld [vmem:[%s236 + $0x8] sm:$0xff]
        %v247 = vld [vmem:[%s1] sm:$0xff]
        %v248 = vld [vmem:[%s1 + $0x8] sm:$0xff]
        %v249 = vld [vmem:[%s1 + $0x10] sm:$0xff]
        %v250 = vld [vmem:[%s1 + $0x18] sm:$0xff]
        %v251 = vld [vmem:[%s1 + $0x20] sm:$0xff]
        %v252 = vld [vmem:[%s1 + $0x28] sm:$0xff]
        %v253 = vld [vmem:[%s1 + $0x30] sm:$0xff]
        %v254 = vld [vmem:[%s1 + $0x38] sm:$0xff]
        %v255 = vld [vmem:[%s1 + $0x40] sm:$0xff]
        %v256 = vld [vmem:[%s1 + $0x48] sm:$0xff]
        %v257 = vld [vmem:[%s1 + $0x50] sm:$0xff]
        %v258 = vld [vmem:[%s1 + $0x58] sm:$0xff]
        %v259 = vld [vmem:[%s1 + $0x60] sm:$0xff]
        %v260 = vld [vmem:[%s1 + $0x68] sm:$0xff]
        %v261 = vld [vmem:[%s1 + $0x70] sm:$0xff]
        %v262 = vld [vmem:[%s1 + $0x78] sm:$0xff]
        %v263 = vld [vmem:[%s1 + $0x80] sm:$0xff]
        %v264 = vld [vmem:[%s1 + $0x88] sm:$0xff]
        %v265 = vld [vmem:[%s1 + $0x90] sm:$0xff]
        %v266 = vld [vmem:[%s1 + $0x98] sm:$0xff]
        %v267 = vld [vmem:[%s1 + $0xa0] sm:$0xff]
        %v268 = vld [vmem:[%s1 + $0xa8] sm:$0xff]
        %v269 = vld [vmem:[%s1 + $0xb0] sm:$0xff]
        %v270 = vld [vmem:[%s1 + $0xb8] sm:$0xff]
        %v271 = vld [vmem:[%s1 + $0xc0] sm:$0xff]
        %v272 = vld [vmem:[%s1 + $0xc8] sm:$0xff]
        %v273 = vld [vmem:[%s1 + $0xd0] sm:$0xff]
        %v274 = vld [vmem:[%s1 + $0xd8] sm:$0xff]
        %v275 = vld [vmem:[%s1 + $0xe0] sm:$0xff]
        %v276 = vld [vmem:[%s1 + $0xe8] sm:$0xff]
        %v277 = vld [vmem:[%s1 + $0xf0] sm:$0xff]
        %v278 = vld [vmem:[%s1 + $0xf8] sm:$0xff]
        %v279 = vld [vmem:[%s2] sm:$0x3]
        %v281 = vlaneseq
        %v282 = vshrl.u32 %v281, 7
        %v283 = vsub.s32 0, %v282
        %v284 = vrot.slane %v279, %v283
        %v285 = vlaneseq
        %v286 = vshrl.u32 %v285, 7
        %v287 = vsub.s32 1, %v286
        %v288 = vrot.slane %v279, %v287
        %291 = vmatprep.subr.mxu0 %v248
        %292 = vmatpush1.msra.mxu0 %v247
        %293 = vmatprep.subr.mxu0 %v250
        %294 = vmatpush1.msra.mxu0 %v249
        %295 = vmatprep.subr.mxu0 %v252
        %296 = vmatpush1.msra.mxu0 %v251
        %297 = vmatprep.subr.mxu0 %v254
        %298 = vmatpush1.msra.mxu0 %v253
        %299 = vmatprep.subr.mxu0 %v256
        %300 = vmatpush1.msra.mxu0 %v255
        %301 = vmatprep.subr.mxu0 %v258
        %302 = vmatpush1.msra.mxu0 %v257
        %303 = vmatprep.subr.mxu0 %v260
        %304 = vmatpush1.msra.mxu0 %v259
        %305 = vmatprep.subr.mxu0 %v262
        %306 = vmatpush1.msra.mxu0 %v261
        %307 = vmatprep.subr.mxu0 %v264
        %308 = vmatpush1.msra.mxu0 %v263
        %309 = vmatprep.subr.mxu0 %v266
        %310 = vmatpush1.msra.mxu0 %v265
        %311 = vmatprep.subr.mxu0 %v268
        %312 = vmatpush1.msra.mxu0 %v267
        %313 = vmatprep.subr.mxu0 %v270
        %314 = vmatpush1.msra.mxu0 %v269
        %315 = vmatprep.subr.mxu0 %v272
        %316 = vmatpush1.msra.mxu0 %v271
        %317 = vmatprep.subr.mxu0 %v274
        %318 = vmatpush1.msra.mxu0 %v273
        %319 = vmatprep.subr.mxu0 %v276
        %320 = vmatpush1.msra.mxu0 %v275
        %321 = vmatprep.subr.mxu0 %v278
        %322 = vmatpush1.msra.mxu0 %v277
        %323 = vmatprep.subr.mxu0 0.0
        %324 = vmatpush1.msra.mxu0 0.0
        %325 = vmatprep.subr.mxu0 0.0
        %326 = vmatpush1.msra.mxu0 0.0
        %327 = vmatprep.subr.mxu0 0.0
        %328 = vmatpush1.msra.mxu0 0.0
        %329 = vmatprep.subr.mxu0 0.0
        %330 = vmatpush1.msra.mxu0 0.0
        %331 = vmatprep.subr.mxu0 0.0
        %332 = vmatpush1.msra.mxu0 0.0
        %333 = vmatprep.subr.mxu0 0.0
        %334 = vmatpush1.msra.mxu0 0.0
        %335 = vmatprep.subr.mxu0 0.0
        %336 = vmatpush1.msra.mxu0 0.0
        %337 = vmatprep.subr.mxu0 0.0
        %338 = vmatpush1.msra.mxu0 0.0
        %339 = vmatprep.subr.mxu0 0.0
        %340 = vmatpush1.msra.mxu0 0.0
        %341 = vmatprep.subr.mxu0 0.0
        %342 = vmatpush1.msra.mxu0 0.0
        %343 = vmatprep.subr.mxu0 0.0
        %344 = vmatpush1.msra.mxu0 0.0
        %345 = vmatprep.subr.mxu0 0.0
        %346 = vmatpush1.msra.mxu0 0.0
        %347 = vmatprep.subr.mxu0 0.0
        %348 = vmatpush1.msra.mxu0 0.0
        %349 = vmatprep.subr.mxu0 0.0
        %350 = vmatpush1.msra.mxu0 0.0
        %351 = vmatprep.subr.mxu0 0.0
        %352 = vmatpush1.msra.mxu0 0.0
        %353 = vmatprep.subr.mxu0 0.0
        %354 = vmatpush1.msra.mxu0 0.0
        %355 = vmatprep.mubr.f32.mxu0 0.0
        %356 = vmatmul.mubr.f32.gmra.mrb[0].mxu0 %v245
        %v357 = vpop.f32.mrb[0].mxu0
        %v358 = vadd.f32 %v284, %v357
        %v359 = vpop.f32.mrb[0].mxu0
        %v360 = vadd.f32 %v288, %v359
        %361 = vmatprep.mubr.f32.mxu0 0.0
        %362 = vmatmul.mubr.f32.gmra.mrb[0].mxu0 %v246
        %v363 = vpop.f32.mrb[0].mxu0
        %v364 = vadd.f32 %v284, %v363
        %v365 = vpop.f32.mrb[0].mxu0
        %v366 = vadd.f32 %v288, %v365
        %367 = vdwg.mxu0
        %v368 = vmax.f32 %v358, 0.0
        %v369 = vmax.f32 %v360, 0.0
        %v370 = vmax.f32 %v364, 0.0
        %v371 = vmax.f32 %v366, 0.0
        %v372 = vld [vmem:[#allocation2] sm:$0xff]
        %v373 = vld [vmem:[#allocation2 + $0x8] sm:$0xff]
        %v374 = vld [vmem:[#allocation2 + $0x10] sm:$0xff]
        %v375 = vld [vmem:[#allocation2 + $0x18] sm:$0xff]
        %v376 = vld [vmem:[#allocation2 + $0x20] sm:$0xff]
        %v377 = vld [vmem:[#allocation2 + $0x28] sm:$0xff]
        %v378 = vld [vmem:[#allocation2 + $0x30] sm:$0xff]
        %v379 = vld [vmem:[#allocation2 + $0x38] sm:$0xff]
        %v380 = vld [vmem:[#allocation2 + $0x40] sm:$0xff]
        %v381 = vld [vmem:[#allocation2 + $0x48] sm:$0xff]
        %v382 = vld [vmem:[#allocation2 + $0x50] sm:$0xff]
        %v383 = vld [vmem:[#allocation2 + $0x58] sm:$0xff]
        %v384 = vld [vmem:[#allocation2 + $0x60] sm:$0xff]
        %v385 = vld [vmem:[#allocation2 + $0x68] sm:$0xff]
        %v386 = vld [vmem:[#allocation2 + $0x70] sm:$0xff]
        %v387 = vld [vmem:[#allocation2 + $0x78] sm:$0xff]
        %v388 = vld [vmem:[#allocation2 + $0x80] sm:$0xff]
        %v389 = vld [vmem:[#allocation2 + $0x88] sm:$0xff]
        %v390 = vld [vmem:[#allocation2 + $0x90] sm:$0xff]
        %v391 = vld [vmem:[#allocation2 + $0x98] sm:$0xff]
        %v392 = vld [vmem:[#allocation2 + $0xa0] sm:$0xff]
        %v393 = vld [vmem:[#allocation2 + $0xa8] sm:$0xff]
        %v394 = vld [vmem:[#allocation2 + $0xb0] sm:$0xff]
        %v395 = vld [vmem:[#allocation2 + $0xb8] sm:$0xff]
        %v396 = vld [vmem:[#allocation2 + $0xc0] sm:$0xff]
        %v397 = vld [vmem:[#allocation2 + $0xc8] sm:$0xff]
        %v398 = vld [vmem:[#allocation2 + $0xd0] sm:$0xff]
        %v399 = vld [vmem:[#allocation2 + $0xd8] sm:$0xff]
        %v400 = vld [vmem:[#allocation2 + $0xe0] sm:$0xff]
        %v401 = vld [vmem:[#allocation2 + $0xe8] sm:$0xff]
        %v402 = vld [vmem:[#allocation2 + $0xf0] sm:$0xff]
        %v403 = vld [vmem:[#allocation2 + $0xf8] sm:$0xff]
        %v404 = vld [vmem:[#allocation2 + $0x100] sm:$0xff]
        %v405 = vld [vmem:[#allocation2 + $0x108] sm:$0xff]
        %v406 = vld [vmem:[#allocation2 + $0x110] sm:$0xff]
        %v407 = vld [vmem:[#allocation2 + $0x118] sm:$0xff]
        %v408 = vld [vmem:[#allocation2 + $0x120] sm:$0xff]
        %v409 = vld [vmem:[#allocation2 + $0x128] sm:$0xff]
        %v410 = vld [vmem:[#allocation2 + $0x130] sm:$0xff]
        %v411 = vld [vmem:[#allocation2 + $0x138] sm:$0xff]
        %v412 = vld [vmem:[#allocation2 + $0x140] sm:$0xff]
        %v413 = vld [vmem:[#allocation2 + $0x148] sm:$0xff]
        %v414 = vld [vmem:[#allocation2 + $0x150] sm:$0xff]
        %v415 = vld [vmem:[#allocation2 + $0x158] sm:$0xff]
        %v416 = vld [vmem:[#allocation2 + $0x160] sm:$0xff]
        %v417 = vld [vmem:[#allocation2 + $0x168] sm:$0xff]
        %v418 = vld [vmem:[#allocation2 + $0x170] sm:$0xff]
        %v419 = vld [vmem:[#allocation2 + $0x178] sm:$0xff]
        %v420 = vld [vmem:[#allocation2 + $0x180] sm:$0xff]
        %v421 = vld [vmem:[#allocation2 + $0x188] sm:$0xff]
        %v422 = vld [vmem:[#allocation2 + $0x190] sm:$0xff]
        %v423 = vld [vmem:[#allocation2 + $0x198] sm:$0xff]
        %v424 = vld [vmem:[#allocation2 + $0x1a0] sm:$0xff]
        %v425 = vld [vmem:[#allocation2 + $0x1a8] sm:$0xff]
        %v426 = vld [vmem:[#allocation2 + $0x1b0] sm:$0xff]
        %v427 = vld [vmem:[#allocation2 + $0x1b8] sm:$0xff]
        %v428 = vld [vmem:[#allocation2 + $0x1c0] sm:$0xff]
        %v429 = vld [vmem:[#allocation2 + $0x1c8] sm:$0xff]
        %v430 = vld [vmem:[#allocation2 + $0x1d0] sm:$0xff]
        %v431 = vld [vmem:[#allocation2 + $0x1d8] sm:$0xff]
        %v432 = vld [vmem:[#allocation2 + $0x1e0] sm:$0xff]
        %v433 = vld [vmem:[#allocation2 + $0x1e8] sm:$0xff]
        %v434 = vld [vmem:[#allocation2 + $0x1f0] sm:$0xff]
        %v435 = vld [vmem:[#allocation2 + $0x1f8] sm:$0xff]
        %v436 = vld [vmem:[%s4] sm:$0x3]
        %v438 = vlaneseq
        %v439 = vshrl.u32 %v438, 7
        %v440 = vsub.s32 0, %v439
        %v441 = vrot.slane %v436, %v440
        %v442 = vlaneseq
        %v443 = vshrl.u32 %v442, 7
        %v444 = vsub.s32 1, %v443
        %v445 = vrot.slane %v436, %v444
        %448 = vmatprep.subr.mxu0 %v373
        %449 = vmatpush1.msra.mxu0 %v372
        %450 = vmatprep.subr.mxu0 %v375
        %451 = vmatpush1.msra.mxu0 %v374
        %452 = vmatprep.subr.mxu0 %v377
        %453 = vmatpush1.msra.mxu0 %v376
        %454 = vmatprep.subr.mxu0 %v379
        %455 = vmatpush1.msra.mxu0 %v378
        %456 = vmatprep.subr.mxu0 %v381
        %457 = vmatpush1.msra.mxu0 %v380
        %458 = vmatprep.subr.mxu0 %v383
        %459 = vmatpush1.msra.mxu0 %v382
        %460 = vmatprep.subr.mxu0 %v385
        %461 = vmatpush1.msra.mxu0 %v384
        %462 = vmatprep.subr.mxu0 %v387
        %463 = vmatpush1.msra.mxu0 %v386
        %464 = vmatprep.subr.mxu0 %v389
        %465 = vmatpush1.msra.mxu0 %v388
        %466 = vmatprep.subr.mxu0 %v391
        %467 = vmatpush1.msra.mxu0 %v390
        %468 = vmatprep.subr.mxu0 %v393
        %469 = vmatpush1.msra.mxu0 %v392
        %470 = vmatprep.subr.mxu0 %v395
        %471 = vmatpush1.msra.mxu0 %v394
        %472 = vmatprep.subr.mxu0 %v397
        %473 = vmatpush1.msra.mxu0 %v396
        %474 = vmatprep.subr.mxu0 %v399
        %475 = vmatpush1.msra.mxu0 %v398
        %476 = vmatprep.subr.mxu0 %v401
        %477 = vmatpush1.msra.mxu0 %v400
        %478 = vmatprep.subr.mxu0 %v403
        %479 = vmatpush1.msra.mxu0 %v402
        %480 = vmatprep.subr.mxu0 %v405
        %481 = vmatpush1.msra.mxu0 %v404
        %482 = vmatprep.subr.mxu0 %v407
        %483 = vmatpush1.msra.mxu0 %v406
        %484 = vmatprep.subr.mxu0 %v409
        %485 = vmatpush1.msra.mxu0 %v408
        %486 = vmatprep.subr.mxu0 %v411
        %487 = vmatpush1.msra.mxu0 %v410
        %488 = vmatprep.subr.mxu0 %v413
        %489 = vmatpush1.msra.mxu0 %v412
        %490 = vmatprep.subr.mxu0 %v415
        %491 = vmatpush1.msra.mxu0 %v414
        %492 = vmatprep.subr.mxu0 %v417
        %493 = vmatpush1.msra.mxu0 %v416
        %494 = vmatprep.subr.mxu0 %v419
        %495 = vmatpush1.msra.mxu0 %v418
        %496 = vmatprep.subr.mxu0 %v421
        %497 = vmatpush1.msra.mxu0 %v420
        %498 = vmatprep.subr.mxu0 %v423
        %499 = vmatpush1.msra.mxu0 %v422
        %500 = vmatprep.subr.mxu0 %v425
        %501 = vmatpush1.msra.mxu0 %v424
        %502 = vmatprep.subr.mxu0 %v427
        %503 = vmatpush1.msra.mxu0 %v426
        %504 = vmatprep.subr.mxu0 %v429
        %505 = vmatpush1.msra.mxu0 %v428
        %506 = vmatprep.subr.mxu0 %v431
        %507 = vmatpush1.msra.mxu0 %v430
        %508 = vmatprep.subr.mxu0 %v433
        %509 = vmatpush1.msra.mxu0 %v432
        %510 = vmatprep.subr.mxu0 %v435
        %511 = vmatpush1.msra.mxu0 %v434
        %512 = vmatprep.mubr.f32.mxu0 %v369
        %513 = vmatmul.mubr.f32.gmra.mrb[0].mxu0 %v368
        %v514 = vpop.f32.mrb[0].mxu0
        %v515 = vadd.f32 %v441, %v514
        %v516 = vpop.f32.mrb[0].mxu0
        %v517 = vadd.f32 %v445, %v516
        %518 = vmatprep.mubr.f32.mxu0 %v371
        %519 = vmatmul.mubr.f32.gmra.mrb[0].mxu0 %v370
        %v520 = vpop.f32.mrb[0].mxu0
        %v521 = vadd.f32 %v441, %v520
        %v522 = vpop.f32.mrb[0].mxu0
        %v523 = vadd.f32 %v445, %v522
        %524 = vdwg.mxu0
        %v525 = vmax.f32 %v515, 0.0
        %v526 = vmax.f32 %v517, 0.0
        %v527 = vmax.f32 %v521, 0.0
        %v528 = vmax.f32 %v523, 0.0
        %529 = vst [vmem:[%s243] sm:$0xff] %v525
        %530 = vst [vmem:[%s243 + $0x8] sm:$0xff] %v526
        %531 = vst [vmem:[%s243 + $0x10] sm:$0xff] %v527
        %532 = vst [vmem:[%s243 + $0x18] sm:$0xff] %v528
        %s533 = smul.u32 2, %s17
        %p534 = scmp.lt.s32.totalorder %s533, 3
        %s535 = scalar_select %p534, %s533, 3
        %s536 = smul.addr %s535, 2
        %s537 = smul.addr %s536, 8
        %s538 = scalar_lea.vmem %s5, %s537
        // Predicated region
        $region45: #{mlp_forward.1} parent=39 // pred_check
          %p539 = pneg %p145
        $region46: #{mlp_forward.1} parent=39 // pred_check_branch
          %541 = sbr.rel (%p539) target = $region48
        $region47: #{mlp_forward.1} parent=39 // pred_region
          %s542 = smul.u32 2, %s17
        $region48: #{mlp_forward.1} parent=39 // pred_fallthru
          _
      $region40: #{mlp_forward.1} parent=5 // pred_fallthru
        _
      %p543 = scmp.le.s32.totalorder 2, %s12
      // Predicated region
      $region49: #{mlp_forward.1} parent=5 // pred_check
        %p544 = pneg %p543
      $region50: #{mlp_forward.1} parent=5 // pred_check_branch
        %546 = sbr.rel (%p544) target = $region52
      $region51: #{mlp_forward.1} parent=5 // pred_region
        %s547 = ssub.s32 %s12, 2
        // Predicated region
        $region53: #{mlp_forward.1} parent=51 // pred_check
          %p548 = pneg %p151
        $region54: #{mlp_forward.1} parent=51 // pred_check_branch
          %550 = sbr.rel (%p548) target = $region56
        $region55: #{mlp_forward.1} parent=51 // pred_region
          %s551 = smul.u32 2, %s18
          %p552 = scmp.lt.s32.totalorder %s551, 3
          %s553 = scalar_select %p552, %s551, 3
          %s554 = smul.addr %s553, 2
          %s555 = smul.addr %s554, 8
          %s556 = scalar_lea.vmem %s5, %s555
        $region56: #{mlp_forward.1} parent=51 // pred_fallthru
          _
      $region52: #{mlp_forward.1} parent=5 // pred_fallthru
        _
    $region6: #{mlp_forward.1} parent=1 // loop_footer
      %s16 = sadd.s32 1, %s12
    $region7: #{mlp_forward.1} parent=1 // loop_footer_branch
      %11 = sbr.rel target = $region3
    $region8: #{mlp_forward.1} parent=1 // loop_exit
      _
    %557 = vsyncpa [#allocation3], 1
    %s558 = scalar_lea.sflag [#allocation3], 1
    %559 = vsyncpa %s558, 1

</llo_original>
